<compile_context>
chip_gen: v7x
topology: tpu7x:2x2x1
jax: 0.10.0
libtpu: 0.0.40
codegen_flags: <defaults>
</compile_context>

<pallas_src>
import jax
import jax.numpy as jnp
from jax.experimental import pallas as pl
from jax.experimental.pallas import tpu as pltpu


def qvalue_mlp_kernel(x_ref, w1_ref, b1_ref, w2_ref, b2_ref, w3_ref, b3_ref, o_ref):
    # In-kernel cast of the activation tile to the matmul dtype (no-op for f32).
    x = x_ref[...].astype(w1_ref.dtype)
    # Layer 1: Linear + ReLU (f32 accumulate; bias + ReLU fused on the accumulator).
    h = jnp.maximum(
        jnp.dot(x, w1_ref[...], preferred_element_type=jnp.float32) + b1_ref[...],
        0.0)
    # Layer 2: Linear + ReLU.
    h = jnp.maximum(
        jnp.dot(h.astype(w2_ref.dtype), w2_ref[...],
                preferred_element_type=jnp.float32) + b2_ref[...],
        0.0)
    # Layer 3 (Q head): Linear, no activation (last layer, last_active=False).
    y = jnp.dot(h.astype(w3_ref.dtype), w3_ref[...],
                preferred_element_type=jnp.float32) + b3_ref[...]
    o_ref[...] = y.astype(o_ref.dtype)


def _round_up(x, m):
    return ((x + m - 1) // m) * m


def qvalue_forward(x, params, *, block_batch=8192, matmul_dtype=jnp.bfloat16):
    """x: (B, obs_dim) f32. params: (w1,b1,w2,b2,w3,b3), wi (in,out), bi (1,out)."""
    w1, b1, w2, b2, w3, b3 = params
    B, obs_dim = x.shape
    h1, h2, out_dim = w1.shape[1], w2.shape[1], w3.shape[1]

    # Tiny weights: pre-cast in the wrapper (negligible). x is NOT pre-cast.
    w1d, w2d, w3d = (w.astype(matmul_dtype) for w in (w1, w2, w3))
    b1f, b2f, b3f = (b.astype(jnp.float32) for b in (b1, b2, b3))

    # Batch tile: as large as block_batch, but capped at ~half the batch
    # (sublane-aligned) so the grid has >= 2 steps for megacore sharding.
    # The last tile may be ragged; no wrapper-side padding is materialized.
    TB = min(block_batch, max(8, _round_up(-(-B // 2), 8)))
    grid = (pl.cdiv(B, TB),)

    def batch_spec(cols):
        return pl.BlockSpec((TB, cols), lambda i: (i, 0))

    def pinned_spec(shape):
        # Same block index every grid step -> Pallas keeps it resident in VMEM.
        return pl.BlockSpec(shape, lambda i: (0, 0))

    flops = 2 * B * (obs_dim * h1 + h1 * h2 + h2 * out_dim)
    param_bytes = sum(int(a.size) * a.dtype.itemsize
                      for a in (w1d, b1f, w2d, b2f, w3d, b3f))
    bytes_accessed = B * (obs_dim * x.dtype.itemsize + out_dim * 4) + param_bytes

    out = pl.pallas_call(
        qvalue_mlp_kernel,
        out_shape=jax.ShapeDtypeStruct((B, out_dim), jnp.float32),
        grid=grid,
        in_specs=[batch_spec(obs_dim),
                  pinned_spec(w1d.shape), pinned_spec(b1f.shape),
                  pinned_spec(w2d.shape), pinned_spec(b2f.shape),
                  pinned_spec(w3d.shape), pinned_spec(b3f.shape)],
        out_specs=batch_spec(out_dim),
        compiler_params=pltpu.CompilerParams(
            dimension_semantics=("parallel",),
            vmem_limit_bytes=32 * 1024 * 1024),
        cost_estimate=pl.CostEstimate(flops=flops, transcendentals=0,
                                      bytes_accessed=bytes_accessed),
    )(x, w1d, b1f, w2d, b2f, w3d, b3f)

    return out


def init_params(key, dims):
    """Deterministic init mimicking nn.Linear default (uniform +/- 1/sqrt(fan_in))."""
    params = []
    for i in range(len(dims) - 1):
        fan_in, fan_out = dims[i], dims[i + 1]
        key, kw, kb = jax.random.split(key, 3)
        bound = 1.0 / jnp.sqrt(jnp.float32(fan_in))
        w = jax.random.uniform(kw, (fan_in, fan_out), jnp.float32, -bound, bound)
        b = jax.random.uniform(kb, (1, fan_out), jnp.float32, -bound, bound)
        params.extend([w, b])
    return tuple(params)


def qvalue_ref_f32(x, params):
    """Pure f32 JAX reference."""
    w1, b1, w2, b2, w3, b3 = params
    h = jnp.maximum(x @ w1 + b1, 0.0)
    h = jnp.maximum(h @ w2 + b2, 0.0)
    return h @ w3 + b3


def qvalue_ref_mixed(x, params, dot_dtype):
    """Reference matching the kernel's mixed precision (low-precision operands, f32 accum)."""
    w1, b1, w2, b2, w3, b3 = params

    def lin(a, w, b):
        return jnp.dot(a.astype(dot_dtype), w.astype(dot_dtype),
                       preferred_element_type=jnp.float32) + b

    h = jnp.maximum(lin(x, w1, b1), 0.0)
    h = jnp.maximum(lin(h, w2, b2), 0.0)
    return lin(h, w3, b3)


if __name__ == "__main__":
    obs_dim = 32
    mlp_dims = [obs_dim, 64, 64, 8]   # observation_space + config.Network.mlp_dims

    key = jax.random.PRNGKey(0)
    key, kparams = jax.random.split(key)
    params = init_params(kparams, mlp_dims)

    # --- Small-batch check (B=2): single ragged tile (TB=8 block on a 2-row array). ---
    key, kx = jax.random.split(key)
    x_small = jax.random.normal(kx, (2, obs_dim), jnp.float32)
    y_small = jax.block_until_ready(qvalue_forward(x_small, params))
    assert y_small.shape == (2, mlp_dims[-1])
    assert jnp.allclose(y_small, qvalue_ref_mixed(x_small, params, jnp.bfloat16),
                        atol=1e-3, rtol=1e-3), "small-batch mismatch vs mixed-precision ref"
    assert jnp.allclose(y_small, qvalue_ref_f32(x_small, params),
                        atol=5e-2, rtol=5e-2), "small-batch mismatch vs f32 ref"

    # --- Multi-tile check (B=1000, block_batch=512 -> TB=504, grid=2, ragged last tile):
    #     exercises resident weights, >=2-step megacore grid and ragged-edge clipping. ---
    key, kx2 = jax.random.split(key)
    x_big = jax.random.normal(kx2, (1000, obs_dim), jnp.float32)
    y_big = jax.block_until_ready(qvalue_forward(x_big, params, block_batch=512))
    assert y_big.shape == (1000, mlp_dims[-1])
    assert jnp.allclose(y_big, qvalue_ref_mixed(x_big, params, jnp.bfloat16),
                        atol=1e-3, rtol=1e-3), "multi-tile mismatch vs mixed-precision ref"
    assert jnp.allclose(y_big, qvalue_ref_f32(x_big, params),
                        atol=5e-2, rtol=5e-2), "multi-tile mismatch vs f32 ref"

    # --- f32-parity path (review correctness note): full-f32 matmuls for v5e / bit parity. ---
    y_f32 = jax.block_until_ready(
        qvalue_forward(x_big, params, block_batch=512, matmul_dtype=jnp.float32))
    assert jnp.allclose(y_f32, qvalue_ref_f32(x_big, params),
                        atol=1e-5, rtol=1e-5), "f32-path mismatch vs f32 ref"

    print("KERNEL_OK")
</pallas_src>

<mosaic_0001>
module attributes {stable_mosaic.version = 11 : i64} {
  func.func @qvalue_mlp_kernel(%arg0: i32, %arg1: memref<8x32xf32, #tpu.memory_space<vmem>>, %arg2: memref<32x64xbf16, #tpu.memory_space<vmem>>, %arg3: memref<1x64xf32, #tpu.memory_space<vmem>>, %arg4: memref<64x64xbf16, #tpu.memory_space<vmem>>, %arg5: memref<1x64xf32, #tpu.memory_space<vmem>>, %arg6: memref<64x8xbf16, #tpu.memory_space<vmem>>, %arg7: memref<1x8xf32, #tpu.memory_space<vmem>>, %arg8: memref<8x8xf32, #tpu.memory_space<vmem>>) attributes {dimension_semantics = [#tpu.dimension_semantics<parallel>], iteration_bounds = array<i64: 1>, scalar_prefetch = 0 : i64, scratch_operands = 0 : i64, tpu.core_type = #tpu.core_type<tc>, window_params = [{transform_indices = @transform_0, window_bounds = array<i64: 8, 32>}, {pipeline_mode = #tpu.pipeline_mode<synchronous>, transform_indices = @transform_1, window_bounds = array<i64: 32, 64>}, {pipeline_mode = #tpu.pipeline_mode<synchronous>, transform_indices = @transform_2, window_bounds = array<i64: 1, 64>}, {pipeline_mode = #tpu.pipeline_mode<synchronous>, transform_indices = @transform_3, window_bounds = array<i64: 64, 64>}, {pipeline_mode = #tpu.pipeline_mode<synchronous>, transform_indices = @transform_4, window_bounds = array<i64: 1, 64>}, {pipeline_mode = #tpu.pipeline_mode<synchronous>, transform_indices = @transform_5, window_bounds = array<i64: 64, 8>}, {pipeline_mode = #tpu.pipeline_mode<synchronous>, transform_indices = @transform_6, window_bounds = array<i64: 1, 8>}, {transform_indices = @transform_7, window_bounds = array<i64: 8, 8>}]} {
    %c0 = arith.constant 0 : index
    %c0_0 = arith.constant 0 : index
    %0 = vector.load %arg1[%c0, %c0_0] : memref<8x32xf32, #tpu.memory_space<vmem>>, vector<8x32xf32>
    %1 = arith.truncf %0 : vector<8x32xf32> to vector<8x32xbf16>
    %c0_1 = arith.constant 0 : index
    %c0_2 = arith.constant 0 : index
    %2 = vector.load %arg2[%c0_1, %c0_2] : memref<32x64xbf16, #tpu.memory_space<vmem>>, vector<32x64xbf16>
    %cst = arith.constant dense<0.000000e+00> : vector<8x64xf32>
    %3 = tpu.matmul %1, %2, %cst {dimension_numbers = #tpu.dot_dimension_numbers<[1], [0], [0], [1], [0, 0, 1, 1], [], []>} : vector<8x32xbf16>, vector<32x64xbf16>, vector<8x64xf32> -> vector<8x64xf32>
    %c0_3 = arith.constant 0 : index
    %c0_4 = arith.constant 0 : index
    %4 = vector.load %arg3[%c0_3, %c0_4] : memref<1x64xf32, #tpu.memory_space<vmem>>, vector<1x64xf32>
    %5 = vector.broadcast %4 : vector<1x64xf32> to vector<8x64xf32>
    %6 = arith.addf %3, %5 : vector<8x64xf32>
    %cst_5 = arith.constant 0.000000e+00 : f32
    %7 = vector.broadcast %cst_5 : f32 to vector<8x64xf32>
    %8 = arith.maximumf %6, %7 : vector<8x64xf32>
    %9 = arith.truncf %8 : vector<8x64xf32> to vector<8x64xbf16>
    %c0_6 = arith.constant 0 : index
    %c0_7 = arith.constant 0 : index
    %10 = vector.load %arg4[%c0_6, %c0_7] : memref<64x64xbf16, #tpu.memory_space<vmem>>, vector<64x64xbf16>
    %cst_8 = arith.constant dense<0.000000e+00> : vector<8x64xf32>
    %11 = tpu.matmul %9, %10, %cst_8 {dimension_numbers = #tpu.dot_dimension_numbers<[1], [0], [0], [1], [0, 0, 1, 1], [], []>} : vector<8x64xbf16>, vector<64x64xbf16>, vector<8x64xf32> -> vector<8x64xf32>
    %c0_9 = arith.constant 0 : index
    %c0_10 = arith.constant 0 : index
    %12 = vector.load %arg5[%c0_9, %c0_10] : memref<1x64xf32, #tpu.memory_space<vmem>>, vector<1x64xf32>
    %13 = vector.broadcast %12 : vector<1x64xf32> to vector<8x64xf32>
    %14 = arith.addf %11, %13 : vector<8x64xf32>
    %cst_11 = arith.constant 0.000000e+00 : f32
    %15 = vector.broadcast %cst_11 : f32 to vector<8x64xf32>
    %16 = arith.maximumf %14, %15 : vector<8x64xf32>
    %17 = arith.truncf %16 : vector<8x64xf32> to vector<8x64xbf16>
    %c0_12 = arith.constant 0 : index
    %c0_13 = arith.constant 0 : index
    %18 = vector.load %arg6[%c0_12, %c0_13] : memref<64x8xbf16, #tpu.memory_space<vmem>>, vector<64x8xbf16>
    %cst_14 = arith.constant dense<0.000000e+00> : vector<8x8xf32>
    %19 = tpu.matmul %17, %18, %cst_14 {dimension_numbers = #tpu.dot_dimension_numbers<[1], [0], [0], [1], [0, 0, 1, 1], [], []>} : vector<8x64xbf16>, vector<64x8xbf16>, vector<8x8xf32> -> vector<8x8xf32>
    %c0_15 = arith.constant 0 : index
    %c0_16 = arith.constant 0 : index
    %20 = vector.load %arg7[%c0_15, %c0_16] : memref<1x8xf32, #tpu.memory_space<vmem>>, vector<1x8xf32>
    %21 = vector.broadcast %20 : vector<1x8xf32> to vector<8x8xf32>
    %22 = arith.addf %19, %21 : vector<8x8xf32>
    %c0_17 = arith.constant 0 : index
    %c0_18 = arith.constant 0 : index
    %23 = vector.load %arg8[%c0_17, %c0_18] : memref<8x8xf32, #tpu.memory_space<vmem>>, vector<8x8xf32>
    tpu.vector_store %arg8[%c0_17, %c0_18], %22 {strides = array<i32>} : memref<8x8xf32, #tpu.memory_space<vmem>>, vector<8x8xf32>,
    return
  }
  func.func @transform_0(%arg0: i32) -> (i32, i32) {
    %c0_i32 = arith.constant 0 : i32
    %c0_i32_0 = arith.constant 0 : i32
    return %arg0, %c0_i32 : i32, i32
  }
  func.func @transform_1(%arg0: i32) -> (i32, i32) {
    %c0_i32 = arith.constant 0 : i32
    %c0_i32_0 = arith.constant 0 : i32
    %c0_i32_1 = arith.constant 0 : i32
    return %c0_i32, %c0_i32_0 : i32, i32
  }
  func.func @transform_2(%arg0: i32) -> (i32, i32) {
    %c0_i32 = arith.constant 0 : i32
    %c0_i32_0 = arith.constant 0 : i32
    %c0_i32_1 = arith.constant 0 : i32
    return %c0_i32, %c0_i32_0 : i32, i32
  }
  func.func @transform_3(%arg0: i32) -> (i32, i32) {
    %c0_i32 = arith.constant 0 : i32
    %c0_i32_0 = arith.constant 0 : i32
    %c0_i32_1 = arith.constant 0 : i32
    return %c0_i32, %c0_i32_0 : i32, i32
  }
  func.func @transform_4(%arg0: i32) -> (i32, i32) {
    %c0_i32 = arith.constant 0 : i32
    %c0_i32_0 = arith.constant 0 : i32
    %c0_i32_1 = arith.constant 0 : i32
    return %c0_i32, %c0_i32_0 : i32, i32
  }
  func.func @transform_5(%arg0: i32) -> (i32, i32) {
    %c0_i32 = arith.constant 0 : i32
    %c0_i32_0 = arith.constant 0 : i32
    %c0_i32_1 = arith.constant 0 : i32
    return %c0_i32, %c0_i32_0 : i32, i32
  }
  func.func @transform_6(%arg0: i32) -> (i32, i32) {
    %c0_i32 = arith.constant 0 : i32
    %c0_i32_0 = arith.constant 0 : i32
    %c0_i32_1 = arith.constant 0 : i32
    return %c0_i32, %c0_i32_0 : i32, i32
  }
  func.func @transform_7(%arg0: i32) -> (i32, i32) {
    %c0_i32 = arith.constant 0 : i32
    %c0_i32_0 = arith.constant 0 : i32
    return %arg0, %c0_i32 : i32, i32
  }
}

</mosaic_0001>

<llo_original>
// kernel: tpu_custom_call.1
$region0: #{tpu_custom_call.1}
  #allocation0 [shape = 'u32[]', space=smem, size = 0x4, offset = 0x4, fixed_abs, tag = 'smem constant byte address 0x4 - core index']
  #allocation1 [shape = 'u32[144,128]{1,0:T(1,128)}', space=vmem, size = 0x12000, scoped, tag = 'internal scratch']
  %s0 = inlined_call_operand.vmem [shape: f32[2,32], index: 0, kind: input, shape index: {}]
  %s1 = inlined_call_operand.hbm [shape: bf16[32,64], index: 1, kind: input, shape index: {}]
  %s2 = inlined_call_operand.vmem [shape: f32[1,64], index: 2, kind: input, shape index: {}]
  %s3 = inlined_call_operand.vmem [shape: bf16[64,64], index: 3, kind: input, shape index: {}]
  %s4 = inlined_call_operand.vmem [shape: f32[1,64], index: 4, kind: input, shape index: {}]
  %s5 = inlined_call_operand.vmem [shape: bf16[64,8], index: 5, kind: input, shape index: {}]
  %s6 = inlined_call_operand.vmem [shape: f32[1,8], index: 6, kind: input, shape index: {}]
  %s7 = inlined_call_operand.hbm [shape: f32[2,8], index: 7, kind: output, shape index: {}]
  %s8 = sld [smem:[#allocation0]]
  $region42: #{tpu_custom_call.1} parent=0
    _
  %s10 = ssub.s32 1, %s8
  %s11 = scalar_select 0, %s10, %s8
  $region1: #{tpu_custom_call.1} parent=0
    #allocation2 [shape = 'u8[8192]{0}', space=vmem, size = 0x2000, scoped, tag = 'input window, operand 1, single buffered']
    #allocation3 [shape = 's32[1]{0}', space=sflag, size = 0x4, scoped, tag = 'scoped memory for tpu_custom_call.1']
    #allocation4 [shape = 's32[1]{0}', space=sflag, size = 0x4, scoped, tag = 'scoped memory for tpu_custom_call.1']
    #allocation5 [shape = 'u8[4096]{0}', space=vmem, size = 0x1000, scoped, tag = 'output window, operand 0, single buffered']
    %12 = vsyncpa [#allocation3], 0
    %13 = vsyncpa [#allocation4], 0
    // Predicated region
    $region2: #{tpu_custom_call.1} parent=1 // pred_check
      _
    $region3: #{tpu_custom_call.1} parent=1 // pred_check_branch
      %15 = sbr.rel (0) target = $region5
    $region4: #{tpu_custom_call.1} parent=1 // pred_region
      _
    $region5: #{tpu_custom_call.1} parent=1 // pred_fallthru
      _
    // Predicated region
    $region6: #{tpu_custom_call.1} parent=1 // pred_check
      _
    $region7: #{tpu_custom_call.1} parent=1 // pred_check_branch
      %17 = sbr.rel (0) target = $region9
    $region8: #{tpu_custom_call.1} parent=1 // pred_region
      %s19 = ssub.s32 256, 256
      %20 = vsyncadd [#allocation3], %s19
      %s21 = sshll.u32 [#allocation2], 4
      %s22 = int_to_ptr.vmem [resolvable:$true] %s21
      %27 = dma.hbm_to_vmem [thread:$0]  %s1, 256, %s22, [#allocation3], 64, 64, 4
    $region9: #{tpu_custom_call.1} parent=1 // pred_fallthru
      _
    // Predicated region
    $region10: #{tpu_custom_call.1} parent=1 // pred_check
      _
    $region11: #{tpu_custom_call.1} parent=1 // pred_check_branch
      %29 = sbr.rel (0) target = $region13
    $region12: #{tpu_custom_call.1} parent=1 // pred_region
      _
    $region13: #{tpu_custom_call.1} parent=1 // pred_fallthru
      _
    // Predicated region
    $region14: #{tpu_custom_call.1} parent=1 // pred_check
      _
    $region15: #{tpu_custom_call.1} parent=1 // pred_check_branch
      %31 = sbr.rel (0) target = $region17
    $region16: #{tpu_custom_call.1} parent=1 // pred_region
      _
    $region17: #{tpu_custom_call.1} parent=1 // pred_fallthru
      _
    // Predicated region
    $region18: #{tpu_custom_call.1} parent=1 // pred_check
      _
    $region19: #{tpu_custom_call.1} parent=1 // pred_check_branch
      %33 = sbr.rel (0) target = $region21
    $region20: #{tpu_custom_call.1} parent=1 // pred_region
      _
    $region21: #{tpu_custom_call.1} parent=1 // pred_fallthru
      _
    // Predicated region
    $region22: #{tpu_custom_call.1} parent=1 // pred_check
      _
    $region23: #{tpu_custom_call.1} parent=1 // pred_check_branch
      %35 = sbr.rel (0) target = $region25
    $region24: #{tpu_custom_call.1} parent=1 // pred_region
      _
    $region25: #{tpu_custom_call.1} parent=1 // pred_fallthru
      _
    // Predicated region
    $region26: #{tpu_custom_call.1} parent=1 // pred_check
      _
    $region27: #{tpu_custom_call.1} parent=1 // pred_check_branch
      %37 = sbr.rel (0) target = $region29
    $region28: #{tpu_custom_call.1} parent=1 // pred_region
      _
    $region29: #{tpu_custom_call.1} parent=1 // pred_fallthru
      _
    // Predicated region
    $region30: #{tpu_custom_call.1} parent=1 // pred_check
      _
    $region31: #{tpu_custom_call.1} parent=1 // pred_check_branch
      %39 = sbr.rel (0) target = $region33
    $region32: #{tpu_custom_call.1} parent=1 // pred_region
      %40 = dma.done [#allocation3], 256
    $region33: #{tpu_custom_call.1} parent=1 // pred_fallthru
      _
    %v42 = vld [vmem:[%s0] sm:$0xff]
    %v43 = vpack.c.bf16 %v42, %v42
    %v44 = vld [vmem:[#allocation2] sm:$0xf]
    %v45 = vld [vmem:[#allocation2 + $0x4] sm:$0xf]
    %v46 = vld [vmem:[#allocation2 + $0x8] sm:$0xf]
    %v47 = vld [vmem:[#allocation2 + $0xc] sm:$0xf]
    %v48 = vld [vmem:[%s2] sm:$0x1]
    %v50 = vlaneseq
    %v51 = vshrl.u32 %v50, 7
    %v52 = vsub.s32 0, %v51
    %v53 = vrot.slane %v48, %v52
    %v59 = vunpack.c.l.b16 %v44
    %v60 = vunpack.c.l.b16 %v45
    %v61 = vunpack.c.l.b16 %v46
    %v62 = vunpack.c.l.b16 %v47
    %v63 = vpack.c.b16 %v60, %v59
    %v64 = vpack.c.b16 %v62, %v61
    %vm67 = vcmask 261120
    %v69 = vsel %vm67, %v43, 0
    %71 = vmatprep.subr.bf16.mxu0 0
    %72 = vmatpush1.bf16.msra.mxu0 %v63
    %73 = vmatprep.subr.bf16.mxu0 0
    %74 = vmatpush1.bf16.msra.mxu0 %v64
    %75 = vmatprep.subr.bf16.mxu0 0
    %76 = vmatpush1.bf16.msra.mxu0 0
    %77 = vmatprep.subr.bf16.mxu0 0
    %78 = vmatpush1.bf16.msra.mxu0 0
    %79 = vmatprep.subr.bf16.mxu0 0
    %80 = vmatpush1.bf16.msra.mxu0 0
    %81 = vmatprep.subr.bf16.mxu0 0
    %82 = vmatpush1.bf16.msra.mxu0 0
    %83 = vmatprep.subr.bf16.mxu0 0
    %84 = vmatpush1.bf16.msra.mxu0 0
    %85 = vmatprep.subr.bf16.mxu0 0
    %86 = vmatpush1.bf16.msra.mxu0 0
    %87 = vmatprep.subr.bf16.mxu0 0
    %88 = vmatpush1.bf16.msra.mxu0 0
    %89 = vmatprep.subr.bf16.mxu0 0
    %90 = vmatpush1.bf16.msra.mxu0 0
    %91 = vmatprep.subr.bf16.mxu0 0
    %92 = vmatpush1.bf16.msra.mxu0 0
    %93 = vmatprep.subr.bf16.mxu0 0
    %94 = vmatpush1.bf16.msra.mxu0 0
    %95 = vmatprep.subr.bf16.mxu0 0
    %96 = vmatpush1.bf16.msra.mxu0 0
    %97 = vmatprep.subr.bf16.mxu0 0
    %98 = vmatpush1.bf16.msra.mxu0 0
    %99 = vmatprep.subr.bf16.mxu0 0
    %100 = vmatpush1.bf16.msra.mxu0 0
    %101 = vmatprep.subr.bf16.mxu0 0
    %102 = vmatpush1.bf16.msra.mxu0 0
    %103 = vmatprep.mubr.bf16.mxu0 0
    %104 = vmatmul.mubr.bf16.gmra.mrb[0].mxu0 %v69
    %v105 = vpop.f32.mrb[0].mxu0
    %v106 = vadd.f32 %v53, %v105
    %v107 = vpop.f32.mrb[0].mxu0
    %v108 = vpop.f32.mrb[0].mxu0
    %v109 = vpop.f32.mrb[0].mxu0
    %110 = vdwg.mxu0
    %v111 = vmax.f32 %v106, 0.0
    %v112 = vpack.c.bf16 %v111, %v111
    %v113 = vld [vmem:[%s3] sm:$0xf]
    %v114 = vld [vmem:[%s3 + $0x4] sm:$0xf]
    %v115 = vld [vmem:[%s3 + $0x8] sm:$0xf]
    %v116 = vld [vmem:[%s3 + $0xc] sm:$0xf]
    %v117 = vld [vmem:[%s3 + $0x10] sm:$0xf]
    %v118 = vld [vmem:[%s3 + $0x14] sm:$0xf]
    %v119 = vld [vmem:[%s3 + $0x18] sm:$0xf]
    %v120 = vld [vmem:[%s3 + $0x1c] sm:$0xf]
    %v121 = vld [vmem:[%s4] sm:$0x1]
    %v123 = vlaneseq
    %v124 = vshrl.u32 %v123, 7
    %v125 = vsub.s32 0, %v124
    %v126 = vrot.slane %v121, %v125
    %v136 = vunpack.c.l.b16 %v113
    %v137 = vunpack.c.l.b16 %v114
    %v138 = vunpack.c.l.b16 %v115
    %v139 = vunpack.c.l.b16 %v116
    %v140 = vunpack.c.l.b16 %v117
    %v141 = vunpack.c.l.b16 %v118
    %v142 = vunpack.c.l.b16 %v119
    %v143 = vunpack.c.l.b16 %v120
    %v144 = vpack.c.b16 %v137, %v136
    %v145 = vpack.c.b16 %v139, %v138
    %v146 = vpack.c.b16 %v141, %v140
    %v147 = vpack.c.b16 %v143, %v142
    %vm152 = vcmask 523264
    %v154 = vsel %vm152, %v112, 0
    %156 = vmatprep.subr.bf16.mxu0 0
    %157 = vmatpush1.bf16.msra.mxu0 %v144
    %158 = vmatprep.subr.bf16.mxu0 0
    %159 = vmatpush1.bf16.msra.mxu0 %v145
    %160 = vmatprep.subr.bf16.mxu0 0
    %161 = vmatpush1.bf16.msra.mxu0 %v146
    %162 = vmatprep.subr.bf16.mxu0 0
    %163 = vmatpush1.bf16.msra.mxu0 %v147
    %164 = vmatprep.subr.bf16.mxu0 0
    %165 = vmatpush1.bf16.msra.mxu0 0
    %166 = vmatprep.subr.bf16.mxu0 0
    %167 = vmatpush1.bf16.msra.mxu0 0
    %168 = vmatprep.subr.bf16.mxu0 0
    %169 = vmatpush1.bf16.msra.mxu0 0
    %170 = vmatprep.subr.bf16.mxu0 0
    %171 = vmatpush1.bf16.msra.mxu0 0
    %172 = vmatprep.subr.bf16.mxu0 0
    %173 = vmatpush1.bf16.msra.mxu0 0
    %174 = vmatprep.subr.bf16.mxu0 0
    %175 = vmatpush1.bf16.msra.mxu0 0
    %176 = vmatprep.subr.bf16.mxu0 0
    %177 = vmatpush1.bf16.msra.mxu0 0
    %178 = vmatprep.subr.bf16.mxu0 0
    %179 = vmatpush1.bf16.msra.mxu0 0
    %180 = vmatprep.subr.bf16.mxu0 0
    %181 = vmatpush1.bf16.msra.mxu0 0
    %182 = vmatprep.subr.bf16.mxu0 0
    %183 = vmatpush1.bf16.msra.mxu0 0
    %184 = vmatprep.subr.bf16.mxu0 0
    %185 = vmatpush1.bf16.msra.mxu0 0
    %186 = vmatprep.subr.bf16.mxu0 0
    %187 = vmatpush1.bf16.msra.mxu0 0
    %188 = vmatprep.mubr.bf16.mxu0 0
    %189 = vmatmul.mubr.bf16.gmra.mrb[0].mxu0 %v154
    %v190 = vpop.f32.mrb[0].mxu0
    %v191 = vadd.f32 %v126, %v190
    %v192 = vpop.f32.mrb[0].mxu0
    %v193 = vpop.f32.mrb[0].mxu0
    %v194 = vpop.f32.mrb[0].mxu0
    %195 = vdwg.mxu0
    %v196 = vmax.f32 %v191, 0.0
    %v197 = vpack.c.bf16 %v196, %v196
    %v198 = vld [vmem:[%s5] sm:$0xf]
    %v199 = vld [vmem:[%s5 + $0x4] sm:$0xf]
    %v200 = vld [vmem:[%s5 + $0x8] sm:$0xf]
    %v201 = vld [vmem:[%s5 + $0xc] sm:$0xf]
    %v202 = vld [vmem:[%s5 + $0x10] sm:$0xf]
    %v203 = vld [vmem:[%s5 + $0x14] sm:$0xf]
    %v204 = vld [vmem:[%s5 + $0x18] sm:$0xf]
    %v205 = vld [vmem:[%s5 + $0x1c] sm:$0xf]
    %v206 = vld [vmem:[%s6] sm:$0x1]
    %v208 = vlaneseq
    %v209 = vshrl.u32 %v208, 7
    %v210 = vsub.s32 0, %v209
    %v211 = vrot.slane %v206, %v210
    %v221 = vunpack.c.l.b16 %v198
    %v222 = vunpack.c.l.b16 %v199
    %v223 = vunpack.c.l.b16 %v200
    %v224 = vunpack.c.l.b16 %v201
    %v225 = vunpack.c.l.b16 %v202
    %v226 = vunpack.c.l.b16 %v203
    %v227 = vunpack.c.l.b16 %v204
    %v228 = vunpack.c.l.b16 %v205
    %v229 = vpack.c.b16 %v222, %v221
    %v230 = vpack.c.b16 %v224, %v223
    %v231 = vpack.c.b16 %v226, %v225
    %v232 = vpack.c.b16 %v228, %v227
    %v238 = vsel %vm152, %v197, 0
    %240 = vmatprep.subr.bf16.mxu0 0
    %241 = vmatpush1.bf16.msra.mxu0 %v229
    %242 = vmatprep.subr.bf16.mxu0 0
    %243 = vmatpush1.bf16.msra.mxu0 %v230
    %244 = vmatprep.subr.bf16.mxu0 0
    %245 = vmatpush1.bf16.msra.mxu0 %v231
    %246 = vmatprep.subr.bf16.mxu0 0
    %247 = vmatpush1.bf16.msra.mxu0 %v232
    %248 = vmatprep.subr.bf16.mxu0 0
    %249 = vmatpush1.bf16.msra.mxu0 0
    %250 = vmatprep.subr.bf16.mxu0 0
    %251 = vmatpush1.bf16.msra.mxu0 0
    %252 = vmatprep.subr.bf16.mxu0 0
    %253 = vmatpush1.bf16.msra.mxu0 0
    %254 = vmatprep.subr.bf16.mxu0 0
    %255 = vmatpush1.bf16.msra.mxu0 0
    %256 = vmatprep.subr.bf16.mxu0 0
    %257 = vmatpush1.bf16.msra.mxu0 0
    %258 = vmatprep.subr.bf16.mxu0 0
    %259 = vmatpush1.bf16.msra.mxu0 0
    %260 = vmatprep.subr.bf16.mxu0 0
    %261 = vmatpush1.bf16.msra.mxu0 0
    %262 = vmatprep.subr.bf16.mxu0 0
    %263 = vmatpush1.bf16.msra.mxu0 0
    %264 = vmatprep.subr.bf16.mxu0 0
    %265 = vmatpush1.bf16.msra.mxu0 0
    %266 = vmatprep.subr.bf16.mxu0 0
    %267 = vmatpush1.bf16.msra.mxu0 0
    %268 = vmatprep.subr.bf16.mxu0 0
    %269 = vmatpush1.bf16.msra.mxu0 0
    %270 = vmatprep.subr.bf16.mxu0 0
    %271 = vmatpush1.bf16.msra.mxu0 0
    %272 = vmatprep.mubr.bf16.mxu0 0
    %273 = vmatmul.mubr.bf16.gmra.mrb[0].mxu0 %v238
    %v274 = vpop.f32.mrb[0].mxu0
    %v275 = vadd.f32 %v211, %v274
    %v276 = vpop.f32.mrb[0].mxu0
    %v277 = vpop.f32.mrb[0].mxu0
    %v278 = vpop.f32.mrb[0].mxu0
    %279 = vdwg.mxu0
    %vm280 = vcmask 64512
    %281 = vst.msk [vmem:[#allocation5] sm:$0xff] %vm280, %v275
    // Predicated region
    $region34: #{tpu_custom_call.1} parent=1 // pred_check
      _
    $region35: #{tpu_custom_call.1} parent=1 // pred_check_branch
      %283 = sbr.rel (0) target = $region37
    $region36: #{tpu_custom_call.1} parent=1 // pred_region
      %s285 = ssub.s32 128, 32
      %286 = vsyncadd [#allocation4], %s285
      %s287 = sshll.u32 [#allocation5], 4
      %s288 = int_to_ptr.vmem [resolvable:$true] %s287
      %293 = dma.vmem_to_hbm [thread:$0]  %s288, 32, %s7, [#allocation4], 32, 32, 2
    $region37: #{tpu_custom_call.1} parent=1 // pred_fallthru
      _
    // Predicated region
    $region38: #{tpu_custom_call.1} parent=1 // pred_check
      _
    $region39: #{tpu_custom_call.1} parent=1 // pred_check_branch
      %295 = sbr.rel (0) target = $region41
    $region40: #{tpu_custom_call.1} parent=1 // pred_region
      %296 = dma.done [#allocation4], 128
    $region41: #{tpu_custom_call.1} parent=1 // pred_fallthru
      _
    %297 = vsyncpa [#allocation3], 1
    %298 = vsyncpa [#allocation4], 1

</llo_original>
